<compile_context>
chip_gen: v7x
topology: tpu7x:2x2x1
jax: 0.10.0
libtpu: 0.0.40
codegen_flags: <defaults>
</compile_context>

<pallas_src>
import functools

import jax
import jax.numpy as jnp
from jax import lax
from jax.experimental import pallas as pl
from jax.experimental.pallas import tpu as pltpu


def _head_softmax_argmax_kernel(x_ref, wt_ref, b_ref, logits_ref, preds_ref,
                                *, num_classes: int):
    """One (image, pixel-tile): 1x1-conv projection + class softmax + argmax.

    Classes live on sublanes, pixels on lanes, so every store is lane-dense.
    """
    x = x_ref[0]                      # (C_in, T)          f32
    wt = wt_ref[...]                  # (K, C_in)          f32
    b = b_ref[...]                    # (K, 1)             f32

    # 1x1 conv over channels == per-pixel linear projection.
    logits = jnp.dot(wt, x, preferred_element_type=jnp.float32) + b   # (K, T)

    # Stable softmax over the class (sublane) axis.
    m = jnp.max(logits, axis=0, keepdims=True)             # (1, T)
    e = jnp.exp(logits - m)
    denom = jnp.sum(e, axis=0, keepdims=True)               # (1, T)
    probs = e * pl.reciprocal(denom, approx=False)
    logits_ref[0] = probs.astype(logits_ref.dtype)

    # Argmax over classes: reuse the pre-softmax row max m (softmax is
    # monotone -> same argmax; first index attaining max, like torch.argmax).
    idx = lax.broadcasted_iota(jnp.int32, logits.shape, 0)
    cand = jnp.where(logits == m, idx, jnp.int32(num_classes))
    preds_ref[0] = jnp.min(cand, axis=0, keepdims=True).astype(jnp.int32)


def _pick_tile_pixels(hw: int, target: int) -> int:
    """Largest lane-tile <= target that divides H*W and is a multiple of 128
    (falls back to the full extent, which is always a legal block)."""
    if hw <= 128 or hw % 128 != 0:
        return hw
    t = min(target, hw)
    t -= t % 128
    while hw % t != 0:
        t -= 128
    return t


def encoder_decoder_wrapper_forward(x_nchw, w, b, *, target_tile_pixels=8192):
    """x_nchw: (N, C_in, H, W) f32; w: (C_in, K); b: (K,).

    Returns dict with
      'logits': (N, K, H, W) f32 softmax probabilities (NCHW)
      'preds' : (N, H, W)    int32 argmax over the class axis
    """
    N, C_in, H, W = x_nchw.shape
    num_classes = w.shape[1]
    HW = H * W
    tile = _pick_tile_pixels(HW, target_tile_pixels)

    # Pure (contiguous) reshapes — no HBM transposes.
    x_rows = x_nchw.reshape(N, C_in, HW)
    w_t = jnp.transpose(w).reshape(num_classes, C_in)       # tiny
    b2 = b.reshape(num_classes, 1)

    kernel = functools.partial(_head_softmax_argmax_kernel,
                               num_classes=num_classes)

    cost = pl.CostEstimate(
        flops=2 * N * HW * C_in * num_classes,
        transcendentals=N * HW * num_classes,
        bytes_accessed=N * HW * (C_in + num_classes + 1) * 4,
    )

    logits_rows, preds_rows = pl.pallas_call(
        kernel,
        out_shape=(
            jax.ShapeDtypeStruct((N, num_classes, HW), jnp.float32),
            jax.ShapeDtypeStruct((N, 1, HW), jnp.int32),
        ),
        grid_spec=pltpu.PrefetchScalarGridSpec(
            num_scalar_prefetch=0,
            grid=(N, HW // tile),
            in_specs=[
                pl.BlockSpec((1, C_in, tile), lambda n, j: (n, 0, j)),
                pl.BlockSpec((num_classes, C_in), lambda n, j: (0, 0)),
                pl.BlockSpec((num_classes, 1), lambda n, j: (0, 0)),
            ],
            out_specs=[
                pl.BlockSpec((1, num_classes, tile), lambda n, j: (n, 0, j)),
                pl.BlockSpec((1, 1, tile), lambda n, j: (n, 0, j)),
            ],
        ),
        compiler_params=pltpu.CompilerParams(
            dimension_semantics=("parallel", "parallel")),
        cost_estimate=cost,
    )(x_rows, w_t, b2)

    # Outputs are already in NCHW channel order — only free reshapes remain.
    logits = logits_rows.reshape(N, num_classes, H, W)
    preds = preds_rows.reshape(N, H, W)
    return {"logits": logits, "preds": preds}


if __name__ == "__main__":
    # Small deterministic example: batch=2, in-channels=4, spatial=16x16,
    # num_classes=8.
    N, C_in, H, W = 2, 4, 16, 16
    num_classes = 8

    key = jax.random.PRNGKey(0)
    kx, kw, kb = jax.random.split(key, 3)
    x = jax.random.normal(kx, (N, C_in, H, W), dtype=jnp.float32)
    w = jax.random.normal(kw, (C_in, num_classes), dtype=jnp.float32) * 0.1
    b = jax.random.normal(kb, (num_classes,), dtype=jnp.float32) * 0.1

    net = jax.jit(encoder_decoder_wrapper_forward)(x, w, b)
    jax.block_until_ready(net["logits"])
    jax.block_until_ready(net["preds"])

    # Pure-JAX reference (same math as the PyTorch module would produce).
    pre = jnp.einsum("nchw,ck->nkhw", x, w) + b[None, :, None, None]
    ref_logits = jax.nn.softmax(pre, axis=1)
    ref_preds = jnp.argmax(ref_logits, axis=1).astype(jnp.int32)

    assert net["logits"].shape == (N, num_classes, H, W)
    assert net["preds"].shape == (N, H, W)
    assert jnp.allclose(net["logits"], ref_logits, atol=1e-5, rtol=1e-5)
    assert bool(jnp.all(net["preds"] == ref_preds))

    print("KERNEL_OK")
</pallas_src>

<mosaic_0001>
module attributes {stable_mosaic.version = 11 : i64} {
  func.func @_head_softmax_argmax_kernel(%arg0: i32, %arg1: i32, %arg2: memref<1x4x256xf32, #tpu.memory_space<vmem>>, %arg3: memref<8x4xf32, #tpu.memory_space<vmem>>, %arg4: memref<8x1xf32, #tpu.memory_space<vmem>>, %arg5: memref<1x8x256xf32, #tpu.memory_space<vmem>>, %arg6: memref<1x1x256xi32, #tpu.memory_space<vmem>>) attributes {dimension_semantics = [#tpu.dimension_semantics<parallel>, #tpu.dimension_semantics<parallel>], iteration_bounds = array<i64: 2, 1>, scalar_prefetch = 0 : i64, scratch_operands = 0 : i64, tpu.core_type = #tpu.core_type<tc>, window_params = [{transform_indices = @transform_0, window_bounds = array<i64: 1, 4, 256>}, {pipeline_mode = #tpu.pipeline_mode<synchronous>, transform_indices = @transform_1, window_bounds = array<i64: 8, 4>}, {pipeline_mode = #tpu.pipeline_mode<synchronous>, transform_indices = @transform_2, window_bounds = array<i64: 8, 1>}, {transform_indices = @transform_3, window_bounds = array<i64: 1, 8, 256>}, {transform_indices = @transform_4, window_bounds = array<i64: 1, 1, 256>}]} {
    %c0 = arith.constant 0 : index
    %c0_0 = arith.constant 0 : index
    %c0_1 = arith.constant 0 : index
    %0 = vector.load %arg2[%c0, %c0_0, %c0_1] : memref<1x4x256xf32, #tpu.memory_space<vmem>>, vector<1x4x256xf32>
    %1 = vector.shape_cast %0 : vector<1x4x256xf32> to vector<4x256xf32>
    %c0_2 = arith.constant 0 : index
    %c0_3 = arith.constant 0 : index
    %2 = vector.load %arg3[%c0_2, %c0_3] : memref<8x4xf32, #tpu.memory_space<vmem>>, vector<8x4xf32>
    %c0_4 = arith.constant 0 : index
    %c0_5 = arith.constant 0 : index
    %3 = vector.load %arg4[%c0_4, %c0_5] : memref<8x1xf32, #tpu.memory_space<vmem>>, vector<8x1xf32>
    %cst = arith.constant dense<0.000000e+00> : vector<8x256xf32>
    %4 = tpu.matmul %2, %1, %cst {dimension_numbers = #tpu.dot_dimension_numbers<[1], [0], [0], [1], [0, 0, 1, 1], [], []>} : vector<8x4xf32>, vector<4x256xf32>, vector<8x256xf32> -> vector<8x256xf32>
    %5 = vector.broadcast %3 : vector<8x1xf32> to vector<8x256xf32>
    %6 = arith.addf %4, %5 : vector<8x256xf32>
    %cst_6 = arith.constant dense<0xFF800000> : vector<256xf32>
    %7 = vector.multi_reduction <maximumf>, %6, %cst_6 [0] : vector<8x256xf32> to vector<256xf32>
    %8 = vector.shape_cast %7 : vector<256xf32> to vector<1x256xf32>
    %9 = vector.broadcast %8 : vector<1x256xf32> to vector<8x256xf32>
    %10 = arith.subf %6, %9 : vector<8x256xf32>
    %11 = math.exp %10 : vector<8x256xf32>
    %cst_7 = arith.constant dense<0.000000e+00> : vector<256xf32>
    %12 = vector.multi_reduction <add>, %11, %cst_7 [0] : vector<8x256xf32> to vector<256xf32>
    %13 = vector.shape_cast %12 : vector<256xf32> to vector<1x256xf32>
    %14 = tpu.reciprocal %13 : vector<1x256xf32> -> vector<1x256xf32>
    %15 = vector.broadcast %14 : vector<1x256xf32> to vector<8x256xf32>
    %16 = arith.mulf %11, %15 : vector<8x256xf32>
    %c0_8 = arith.constant 0 : index
    %c0_9 = arith.constant 0 : index
    %c0_10 = arith.constant 0 : index
    %17 = vector.load %arg5[%c0_8, %c0_9, %c0_10] : memref<1x8x256xf32, #tpu.memory_space<vmem>>, vector<1x8x256xf32>
    %18 = vector.shape_cast %17 : vector<1x8x256xf32> to vector<8x256xf32>
    %19 = vector.shape_cast %16 : vector<8x256xf32> to vector<1x8x256xf32>
    tpu.vector_store %arg5[%c0_8, %c0_9, %c0_10], %19 {strides = array<i32>} : memref<1x8x256xf32, #tpu.memory_space<vmem>>, vector<1x8x256xf32>,
    %20 = tpu.iota {dimensions = array<i32: 0>} : vector<8x256xi32>
    %21 = vector.broadcast %8 : vector<1x256xf32> to vector<8x256xf32>
    %22 = arith.cmpf oeq, %6, %21 : vector<8x256xf32>
    %c8_i32 = arith.constant 8 : i32
    %23 = vector.broadcast %c8_i32 : i32 to vector<8x256xi32>
    %24 = arith.select %22, %20, %23 : vector<8x256xi1>, vector<8x256xi32>
    %cst_11 = arith.constant dense<2147483647> : vector<256xi32>
    %25 = vector.multi_reduction <minsi>, %24, %cst_11 [0] : vector<8x256xi32> to vector<256xi32>
    %26 = vector.shape_cast %25 : vector<256xi32> to vector<1x256xi32>
    %c0_12 = arith.constant 0 : index
    %c0_13 = arith.constant 0 : index
    %c0_14 = arith.constant 0 : index
    %27 = vector.load %arg6[%c0_12, %c0_13, %c0_14] : memref<1x1x256xi32, #tpu.memory_space<vmem>>, vector<1x1x256xi32>
    %28 = vector.shape_cast %27 : vector<1x1x256xi32> to vector<1x256xi32>
    %29 = vector.shape_cast %26 : vector<1x256xi32> to vector<1x1x256xi32>
    tpu.vector_store %arg6[%c0_12, %c0_13, %c0_14], %29 {strides = array<i32>} : memref<1x1x256xi32, #tpu.memory_space<vmem>>, vector<1x1x256xi32>,
    return
  }
  func.func @transform_0(%arg0: i32, %arg1: i32) -> (i32, i32, i32) {
    %c0_i32 = arith.constant 0 : i32
    %c0_i32_0 = arith.constant 0 : i32
    return %arg0, %c0_i32, %arg1 : i32, i32, i32
  }
  func.func @transform_1(%arg0: i32, %arg1: i32) -> (i32, i32) {
    %c0_i32 = arith.constant 0 : i32
    %c0_i32_0 = arith.constant 0 : i32
    %c0_i32_1 = arith.constant 0 : i32
    return %c0_i32, %c0_i32_0 : i32, i32
  }
  func.func @transform_2(%arg0: i32, %arg1: i32) -> (i32, i32) {
    %c0_i32 = arith.constant 0 : i32
    %c0_i32_0 = arith.constant 0 : i32
    %c0_i32_1 = arith.constant 0 : i32
    return %c0_i32, %c0_i32_0 : i32, i32
  }
  func.func @transform_3(%arg0: i32, %arg1: i32) -> (i32, i32, i32) {
    %c0_i32 = arith.constant 0 : i32
    %c0_i32_0 = arith.constant 0 : i32
    return %arg0, %c0_i32, %arg1 : i32, i32, i32
  }
  func.func @transform_4(%arg0: i32, %arg1: i32) -> (i32, i32, i32) {
    %c0_i32 = arith.constant 0 : i32
    %c0_i32_0 = arith.constant 0 : i32
    return %arg0, %c0_i32, %arg1 : i32, i32, i32
  }
}

</mosaic_0001>

<llo_original>
// kernel: encoder_decoder_wrapper_forward.1
$region0: #{encoder_decoder_wrapper_forward.1}
  #allocation0 [shape = 'u32[]', space=smem, size = 0x4, offset = 0x4, fixed_abs, tag = 'smem constant byte address 0x4 - core index']
  #allocation1 [shape = 'u32[144,128]{1,0:T(1,128)}', space=vmem, size = 0x12000, scoped, tag = 'internal scratch']
  %s0 = inlined_call_operand.vmem [shape: f32[2,4,256], index: 0, kind: input, shape index: {}]
  %s1 = inlined_call_operand.vmem [shape: f32[8,4], index: 1, kind: input, shape index: {}]
  %s2 = inlined_call_operand.vmem [shape: f32[8,1], index: 2, kind: input, shape index: {}]
  %s3 = inlined_call_operand.vmem [shape: f32[2,8,256], index: 3, kind: output, shape index: {0}]
  %s4 = inlined_call_operand.vmem [shape: s32[2,1,256], index: 4, kind: output, shape index: {1}]
  %5 = xla_tuple %s3, %s4
  %s6 = sld [smem:[#allocation0]]
  $region53: #{encoder_decoder_wrapper_forward.1} parent=0
    _
  %s8 = ssub.s32 1, %s6
  %s9 = scalar_select 0, %s8, %s6
  loop: start=0, step=1, limit=4
  $region2: #{encoder_decoder_wrapper_forward.1} parent=0 // loop_pre_header
    _
  $region3: #{encoder_decoder_wrapper_forward.1} parent=0 // loop_header
    %s11 = sphi 0, %s15
    %p12 = scmp.ge.s32.totalorder %s11, 4
    %s18 = sphi 0, %s30
    %s19 = sphi 0, %s26
    %s20 = sphi 0, %s18
    %s21 = sphi 0, %s19
    %s22 = sphi 0, %s20
    %s23 = sphi 0, %s21
    %s35 = sphi 0, %s37
    %s38 = sphi 0, %s35
    %s39 = sphi 0, %s38
    %s55 = sphi 0, %s39
    %s59 = sphi 0, %s59
    %s61 = sphi 0, %s59
    %s62 = sphi 0, %s61
    %s76 = sphi 0, %s62
    %s80 = sphi 0, %s80
    %s82 = sphi 0, %s80
    %s83 = sphi 0, %s82
    %s97 = sphi 0, %s83
    %s105 = sphi 0, %s107
    %s108 = sphi 0, %s105
    %s109 = sphi 0, %s108
    %s125 = sphi 0, %s109
    %s133 = sphi 0, %s135
    %s136 = sphi 0, %s133
    %s137 = sphi 0, %s136
    %s153 = sphi 0, %s137
  $region4: #{encoder_decoder_wrapper_forward.1} parent=0 // loop_header_branch
    %14 = sbr.rel (%p12) target = $region8
  $region5: #{encoder_decoder_wrapper_forward.1} parent=0 // loop_body
    %s16 = ssub.s32 %s11, 1
    %s17 = ssub.s32 %s11, 2
    %s24 = sadd.s32 1, %s19
    %p25 = scmp.ge.s32.totalorder %s24, 1
    %s26 = scalar_select %p25, 0, %s24
    %s27 = sadd.s32 1, %s18
    %s28 = scalar_select %p25, %s27, %s18
    %p29 = scmp.ge.s32.totalorder %s28, 2
    %s30 = scalar_select %p29, 0, %s28
    %s31 = ssub.s32 %s18, %s30
    %s32 = ssub.s32 %s19, %s26
    %s33 = sor.u32 %s31, %s32
    %p34 = scmp.eq.s32.totalorder %s33, 0
    %s36 = sadd.s32 %s35, 1
    %s37 = scalar_select %p34, %s35, %s36
    %p40 = pneg %p34
    %p41 = scmp.eq.s32.totalorder %s11, 1
    %p42 = por %p40, %p41
    %p43 = scmp.ne.s32.totalorder %s35, %s38
    %p44 = scmp.eq.s32.totalorder %s11, 0
    %p45 = por %p43, %p44
    %p46 = scmp.ne.s32.totalorder %s35, %s38
    %p47 = scmp.eq.s32.totalorder %s16, 1
    %p48 = por %p46, %p47
    %p49 = scmp.ne.s32.totalorder %s38, %s39
    %p50 = scmp.eq.s32.totalorder %s16, 0
    %p51 = por %p49, %p50
    %p52 = scmp.ne.s32.totalorder %s38, %s39
    %p53 = scmp.eq.s32.totalorder %s17, 1
    %p54 = por %p52, %p53
    %p56 = scmp.ne.s32.totalorder %s39, %s55
    %p57 = scmp.eq.s32.totalorder %s17, 0
    %p58 = por %p56, %p57
    %s60 = sadd.s32 %s59, 1
    %p63 = scmp.eq.s32.totalorder %s11, 1
    %p64 = scmp.ne.s32.totalorder %s59, %s61
    %p65 = scmp.eq.s32.totalorder %s11, 0
    %p66 = por %p64, %p65
    %p67 = scmp.ne.s32.totalorder %s59, %s61
    %p68 = scmp.eq.s32.totalorder %s16, 1
    %p69 = por %p67, %p68
    %p70 = scmp.ne.s32.totalorder %s61, %s62
    %p71 = scmp.eq.s32.totalorder %s16, 0
    %p72 = por %p70, %p71
    %p73 = scmp.ne.s32.totalorder %s61, %s62
    %p74 = scmp.eq.s32.totalorder %s17, 1
    %p75 = por %p73, %p74
    %p77 = scmp.ne.s32.totalorder %s62, %s76
    %p78 = scmp.eq.s32.totalorder %s17, 0
    %p79 = por %p77, %p78
    %s81 = sadd.s32 %s80, 1
    %p84 = scmp.eq.s32.totalorder %s11, 1
    %p85 = scmp.ne.s32.totalorder %s80, %s82
    %p86 = scmp.eq.s32.totalorder %s11, 0
    %p87 = por %p85, %p86
    %p88 = scmp.ne.s32.totalorder %s80, %s82
    %p89 = scmp.eq.s32.totalorder %s16, 1
    %p90 = por %p88, %p89
    %p91 = scmp.ne.s32.totalorder %s82, %s83
    %p92 = scmp.eq.s32.totalorder %s16, 0
    %p93 = por %p91, %p92
    %p94 = scmp.ne.s32.totalorder %s82, %s83
    %p95 = scmp.eq.s32.totalorder %s17, 1
    %p96 = por %p94, %p95
    %p98 = scmp.ne.s32.totalorder %s83, %s97
    %p99 = scmp.eq.s32.totalorder %s17, 0
    %p100 = por %p98, %p99
    %s101 = ssub.s32 %s18, %s30
    %s102 = ssub.s32 %s19, %s26
    %s103 = sor.u32 %s101, %s102
    %p104 = scmp.eq.s32.totalorder %s103, 0
    %s106 = sadd.s32 %s105, 1
    %s107 = scalar_select %p104, %s105, %s106
    %p110 = pneg %p104
    %p111 = scmp.eq.s32.totalorder %s11, 1
    %p112 = por %p110, %p111
    %p113 = scmp.ne.s32.totalorder %s105, %s108
    %p114 = scmp.eq.s32.totalorder %s11, 0
    %p115 = por %p113, %p114
    %p116 = scmp.ne.s32.totalorder %s105, %s108
    %p117 = scmp.eq.s32.totalorder %s16, 1
    %p118 = por %p116, %p117
    %p119 = scmp.ne.s32.totalorder %s108, %s109
    %p120 = scmp.eq.s32.totalorder %s16, 0
    %p121 = por %p119, %p120
    %p122 = scmp.ne.s32.totalorder %s108, %s109
    %p123 = scmp.eq.s32.totalorder %s17, 1
    %p124 = por %p122, %p123
    %p126 = scmp.ne.s32.totalorder %s109, %s125
    %p127 = scmp.eq.s32.totalorder %s17, 0
    %p128 = por %p126, %p127
    %s129 = ssub.s32 %s18, %s30
    %s130 = ssub.s32 %s19, %s26
    %s131 = sor.u32 %s129, %s130
    %p132 = scmp.eq.s32.totalorder %s131, 0
    %s134 = sadd.s32 %s133, 1
    %s135 = scalar_select %p132, %s133, %s134
    %p138 = pneg %p132
    %p139 = scmp.eq.s32.totalorder %s11, 1
    %p140 = por %p138, %p139
    %p141 = scmp.ne.s32.totalorder %s133, %s136
    %p142 = scmp.eq.s32.totalorder %s11, 0
    %p143 = por %p141, %p142
    %p144 = scmp.ne.s32.totalorder %s133, %s136
    %p145 = scmp.eq.s32.totalorder %s16, 1
    %p146 = por %p144, %p145
    %p147 = scmp.ne.s32.totalorder %s136, %s137
    %p148 = scmp.eq.s32.totalorder %s16, 0
    %p149 = por %p147, %p148
    %p150 = scmp.ne.s32.totalorder %s136, %s137
    %p151 = scmp.eq.s32.totalorder %s17, 1
    %p152 = por %p150, %p151
    %p154 = scmp.ne.s32.totalorder %s137, %s153
    %p155 = scmp.eq.s32.totalorder %s17, 0
    %p156 = por %p154, %p155
    %p157 = scmp.le.s32.totalorder 1, %s11
    %p158 = scmp.lt.s32.totalorder %s11, 3
    %p159 = pnand %p157, %p158
    %p160 = pneg %p159
    // Predicated region
    $region9: #{encoder_decoder_wrapper_forward.1} parent=5 // pred_check
      _
    $region10: #{encoder_decoder_wrapper_forward.1} parent=5 // pred_check_branch
      %162 = sbr.rel (%p159) target = $region12
    $region11: #{encoder_decoder_wrapper_forward.1} parent=5 // pred_region
      %s163 = ssub.s32 %s11, 1
      // Predicated region
      $region13: #{encoder_decoder_wrapper_forward.1} parent=11 // pred_check
        %p164 = pneg %p72
      $region14: #{encoder_decoder_wrapper_forward.1} parent=11 // pred_check_branch
        %166 = sbr.rel (%p164) target = $region16
      $region15: #{encoder_decoder_wrapper_forward.1} parent=11 // pred_region
        _
      $region16: #{encoder_decoder_wrapper_forward.1} parent=11 // pred_fallthru
        _
      // Predicated region
      $region17: #{encoder_decoder_wrapper_forward.1} parent=11 // pred_check
        %p167 = pneg %p93
      $region18: #{encoder_decoder_wrapper_forward.1} parent=11 // pred_check_branch
        %169 = sbr.rel (%p167) target = $region20
      $region19: #{encoder_decoder_wrapper_forward.1} parent=11 // pred_region
        _
      $region20: #{encoder_decoder_wrapper_forward.1} parent=11 // pred_fallthru
        _
    $region12: #{encoder_decoder_wrapper_forward.1} parent=5 // pred_fallthru
      _
    %p170 = scmp.lt.s32.totalorder %s11, 2
    // Predicated region
    $region21: #{encoder_decoder_wrapper_forward.1} parent=5 // pred_check
      %p171 = pneg %p170
    $region22: #{encoder_decoder_wrapper_forward.1} parent=5 // pred_check_branch
      %173 = sbr.rel (%p171) target = $region24
    $region23: #{encoder_decoder_wrapper_forward.1} parent=5 // pred_region
      // Predicated region
      $region25: #{encoder_decoder_wrapper_forward.1} parent=23 // pred_check
        %p174 = pneg %p45
      $region26: #{encoder_decoder_wrapper_forward.1} parent=23 // pred_check_branch
        %176 = sbr.rel (%p174) target = $region28
      $region27: #{encoder_decoder_wrapper_forward.1} parent=23 // pred_region
        %s177 = smul.u32 2, %s19
        %p178 = scmp.lt.s32.totalorder %s18, 1
        %s179 = scalar_select %p178, %s18, 1
        %p180 = scmp.lt.s32.totalorder %s177, 1
        %s181 = scalar_select %p180, %s177, 1
        %s182 = smul.addr %s179, 2
        %s183 = sadd.s32 %s181, %s182
        %s184 = smul.addr %s183, 4
        %s185 = scalar_lea.vmem %s0, %s184
        %s186 = smul.u32 2, %s19
      $region28: #{encoder_decoder_wrapper_forward.1} parent=23 // pred_fallthru
        _
    $region24: #{encoder_decoder_wrapper_forward.1} parent=5 // pred_fallthru
      _
    %p187 = scmp.le.s32.totalorder 1, %s11
    %p188 = scmp.lt.s32.totalorder %s11, 3
    %p189 = pnand %p187, %p188
    %p190 = pneg %p189
    // Predicated region
    $region29: #{encoder_decoder_wrapper_forward.1} parent=5 // pred_check
      _
    $region30: #{encoder_decoder_wrapper_forward.1} parent=5 // pred_check_branch
      %192 = sbr.rel (%p189) target = $region32
    $region31: #{encoder_decoder_wrapper_forward.1} parent=5 // pred_region
      %s193 = ssub.s32 %s11, 1
      %s194 = smul.u32 2, %s21
      %p195 = scmp.lt.s32.totalorder %s20, 1
      %s196 = scalar_select %p195, %s20, 1
      %p197 = scmp.lt.s32.totalorder %s194, 1
      %s198 = scalar_select %p197, %s194, 1
      %s199 = smul.addr %s196, 2
      %s200 = sadd.s32 %s198, %s199
      %s201 = smul.addr %s200, 4
      %s202 = scalar_lea.vmem %s0, %s201
      %p203 = pneg %p51
      %p204 = pneg %p48
      %p205 = pneg %p72
      %p206 = pneg %p69
      %p207 = pneg %p93
      %p208 = pneg %p90
      %p209 = pneg %p121
      %p210 = pneg %p118
      %s211 = smul.u32 2, %s21
      %p212 = scmp.lt.s32.totalorder %s20, 1
      %s213 = scalar_select %p212, %s20, 1
      %p214 = scmp.lt.s32.totalorder %s211, 1
      %s215 = scalar_select %p214, %s211, 1
      %s216 = smul.addr %s213, 2
      %s217 = sadd.s32 %s215, %s216
      %s218 = smul.addr %s217, 8
      %s219 = scalar_lea.vmem %s3, %s218
      %p220 = pneg %p149
      %p221 = pneg %p146
      %s222 = smul.u32 2, %s21
      %p223 = scmp.lt.s32.totalorder %s20, 1
      %s224 = scalar_select %p223, %s20, 1
      %p225 = scmp.lt.s32.totalorder %s222, 1
      %s226 = scalar_select %p225, %s222, 1
      %s227 = smul.addr %s224, 2
      %s228 = sadd.s32 %s226, %s227
      %s229 = scalar_lea.vmem %s4, %s228
      %s230 = smul.u32 2, %s21
      %p231 = scmp.lt.s32.totalorder %s20, 1
      %s232 = scalar_select %p231, %s20, 1
      %p233 = scmp.lt.s32.totalorder %s230, 1
      %s234 = scalar_select %p233, %s230, 1
      %s235 = smul.addr %s232, 2
      %s236 = sadd.s32 %s234, %s235
      %s237 = smul.addr %s236, 4
      %s238 = scalar_lea.vmem %s0, %s237
      %s239 = smul.u32 2, %s21
      %s240 = smul.u32 2, %s21
      %p241 = scmp.lt.s32.totalorder %s20, 1
      %s242 = scalar_select %p241, %s20, 1
      %p243 = scmp.lt.s32.totalorder %s240, 1
      %s244 = scalar_select %p243, %s240, 1
      %s245 = smul.addr %s242, 2
      %s246 = sadd.s32 %s244, %s245
      %s247 = smul.addr %s246, 8
      %s248 = scalar_lea.vmem %s3, %s247
      %s249 = smul.u32 2, %s21
      %s250 = smul.u32 2, %s21
      %p251 = scmp.lt.s32.totalorder %s20, 1
      %s252 = scalar_select %p251, %s20, 1
      %p253 = scmp.lt.s32.totalorder %s250, 1
      %s254 = scalar_select %p253, %s250, 1
      %s255 = smul.addr %s252, 2
      %s256 = sadd.s32 %s254, %s255
      %s257 = scalar_lea.vmem %s4, %s256
      %s258 = smul.u32 2, %s21
      %v259 = vld [vmem:[%s238] sm:$0xff]
      %v260 = vld [vmem:[%s1] sm:$0xff]
      %v261 = vld [vmem:[%s2] sm:$0xff]
      %263 = vset.pattern.permute.xlu0 0
      %264 = vperm.xlu0 %263, %v261
      %v265 = vpop.permute.xlu0 %264
      %v268 = vcombine.high %v259, %v259
      %vm269 = vcmask 31744
      %v271 = vsel %vm269, %v260, 0
      %vm273 = vcmask 1043456
      %v274 = vsel %vm273, %v259, 0
      %v276 = vsel %vm273, %v268, 0
      %278 = vmatprep.subr.mxu0 %v276
      %279 = vmatpush1.msra.mxu0 %v274
      %280 = vmatprep.subr.mxu0 0.0
      %281 = vmatpush1.msra.mxu0 0.0
      %282 = vmatprep.subr.mxu0 0.0
      %283 = vmatpush1.msra.mxu0 0.0
      %284 = vmatprep.subr.mxu0 0.0
      %285 = vmatpush1.msra.mxu0 0.0
      %286 = vmatprep.subr.mxu0 0.0
      %287 = vmatpush1.msra.mxu0 0.0
      %288 = vmatprep.subr.mxu0 0.0
      %289 = vmatpush1.msra.mxu0 0.0
      %290 = vmatprep.subr.mxu0 0.0
      %291 = vmatpush1.msra.mxu0 0.0
      %292 = vmatprep.subr.mxu0 0.0
      %293 = vmatpush1.msra.mxu0 0.0
      %294 = vmatprep.subr.mxu0 0.0
      %295 = vmatpush1.msra.mxu0 0.0
      %296 = vmatprep.subr.mxu0 0.0
      %297 = vmatpush1.msra.mxu0 0.0
      %298 = vmatprep.subr.mxu0 0.0
      %299 = vmatpush1.msra.mxu0 0.0
      %300 = vmatprep.subr.mxu0 0.0
      %301 = vmatpush1.msra.mxu0 0.0
      %302 = vmatprep.subr.mxu0 0.0
      %303 = vmatpush1.msra.mxu0 0.0
      %304 = vmatprep.subr.mxu0 0.0
      %305 = vmatpush1.msra.mxu0 0.0
      %306 = vmatprep.subr.mxu0 0.0
      %307 = vmatpush1.msra.mxu0 0.0
      %308 = vmatprep.subr.mxu0 0.0
      %309 = vmatpush1.msra.mxu0 0.0
      %310 = vmatprep.subr.mxu0 0.0
      %311 = vmatpush1.msra.mxu0 0.0
      %312 = vmatprep.subr.mxu0 0.0
      %313 = vmatpush1.msra.mxu0 0.0
      %314 = vmatprep.subr.mxu0 0.0
      %315 = vmatpush1.msra.mxu0 0.0
      %316 = vmatprep.subr.mxu0 0.0
      %317 = vmatpush1.msra.mxu0 0.0
      %318 = vmatprep.subr.mxu0 0.0
      %319 = vmatpush1.msra.mxu0 0.0
      %320 = vmatprep.subr.mxu0 0.0
      %321 = vmatpush1.msra.mxu0 0.0
      %322 = vmatprep.subr.mxu0 0.0
      %323 = vmatpush1.msra.mxu0 0.0
      %324 = vmatprep.subr.mxu0 0.0
      %325 = vmatpush1.msra.mxu0 0.0
      %326 = vmatprep.subr.mxu0 0.0
      %327 = vmatpush1.msra.mxu0 0.0
      %328 = vmatprep.subr.mxu0 0.0
      %329 = vmatpush1.msra.mxu0 0.0
      %330 = vmatprep.subr.mxu0 0.0
      %331 = vmatpush1.msra.mxu0 0.0
      %332 = vmatprep.subr.mxu0 0.0
      %333 = vmatpush1.msra.mxu0 0.0
      %334 = vmatprep.subr.mxu0 0.0
      %335 = vmatpush1.msra.mxu0 0.0
      %336 = vmatprep.subr.mxu0 0.0
      %337 = vmatpush1.msra.mxu0 0.0
      %338 = vmatprep.subr.mxu0 0.0
      %339 = vmatpush1.msra.mxu0 0.0
      %340 = vmatprep.subr.mxu0 0.0
      %341 = vmatpush1.msra.mxu0 0.0
      %342 = vmatprep.mubr.f32.mxu0 0.0
      %343 = vmatmul.mubr.f32.gmra.mrb[0].mxu0 %v271
      %v344 = vpop.f32.mrb[0].mxu0
      %v345 = vadd.f32 %v265, %v344
      %v346 = vpop.f32.mrb[0].mxu0
      %v347 = vadd.f32 %v265, %v346
      %348 = vdwg.mxu0
      %v349 = vrot.slane %v345, 4
      %v350 = vmax.f32 %v345, %v349
      %v351 = vrot.slane %v350, 2
      %v352 = vmax.f32 %v350, %v351
      %v353 = vrot.slane %v352, 1
      %v354 = vmax.f32 %v352, %v353
      %v355 = vrot.slane %v347, 4
      %v356 = vmax.f32 %v347, %v355
      %v357 = vrot.slane %v356, 2
      %v358 = vmax.f32 %v356, %v357
      %v359 = vrot.slane %v358, 1
      %v360 = vmax.f32 %v358, %v359
      %v361 = vsub.f32 %v345, %v354
      %v362 = vsub.f32 %v347, %v360
      %v363 = vmul.f32 %v361, 1.442695
      %v364 = vpow.pop %v363
      %v365 = vmul.f32 %v362, 1.442695
      %v366 = vpow.pop %v365
      %v367 = vrot.slane %v364, 4
      %v368 = vadd.f32 %v364, %v367
      %v369 = vrot.slane %v368, 2
      %v370 = vadd.f32 %v368, %v369
      %v371 = vrot.slane %v370, 1
      %v372 = vadd.f32 %v370, %v371
      %v373 = vrot.slane %v366, 4
      %v374 = vadd.f32 %v366, %v373
      %v375 = vrot.slane %v374, 2
      %v376 = vadd.f32 %v374, %v375
      %v377 = vrot.slane %v376, 1
      %v378 = vadd.f32 %v376, %v377
      %v379 = vrcp.pop %v372
      %v380 = vrcp.pop %v378
      %v381 = vmul.f32 %v364, %v379
      %v382 = vmul.f32 %v366, %v380
      %383 = vst [vmem:[%s248] sm:$0xff] %v381
      %384 = vst [vmem:[%s248 + $0x8] sm:$0xff] %v382
      %v385 = vlaneseq
      %v386 = vshrl.u32 %v385, 7
      %vm387 = vcmp.eq.f32.partialorder %v345, %v354
      %vm388 = vcmp.eq.f32.partialorder %v347, %v360
      %v389 = vsel %vm387, %v386, 8
      %v390 = vsel %vm388, %v386, 8
      %v391 = vrot.slane %v389, 4
      %vm392 = vcmp.lt.s32.totalorder %v389, %v391
      %v393 = vsel %vm392, %v389, %v391
      %v394 = vrot.slane %v393, 2
      %vm395 = vcmp.lt.s32.totalorder %v393, %v394
      %v396 = vsel %vm395, %v393, %v394
      %v397 = vrot.slane %v396, 1
      %vm398 = vcmp.lt.s32.totalorder %v396, %v397
      %v399 = vsel %vm398, %v396, %v397
      %v400 = vrot.slane %v390, 4
      %vm401 = vcmp.lt.s32.totalorder %v390, %v400
      %v402 = vsel %vm401, %v390, %v400
      %v403 = vrot.slane %v402, 2
      %vm404 = vcmp.lt.s32.totalorder %v402, %v403
      %v405 = vsel %vm404, %v402, %v403
      %v406 = vrot.slane %v405, 1
      %vm407 = vcmp.lt.s32.totalorder %v405, %v406
      %v408 = vsel %vm407, %v405, %v406
      %v409 = vcombine.low %v399, %v408
      %v411 = vunpack.c.l.s4 1966171168
      %v412 = vunpack.c.0.s8 %v411
      %v413 = vlaneseq
      %v414 = vshrl.u32 %v413, 7
      %v415 = vsub.s32 %v412, %v414
      %v416 = vrot.slane %v409, %v415
      %v418 = vunpack.c.l.s4 1966171168
      %v419 = vunpack.c.0.s8 %v418
      %v420 = vlaneseq
      %v421 = vshrl.u32 %v420, 7
      %v422 = vsub.s32 %v419, %v421
      %v423 = vrot.slane %v416, %v422
      %v424 = vlaneseq
      %vm425 = vcmp.ge.s32.totalorder %v424, 0
      %vm426 = vcmp.lt.s32.totalorder %v424, 256
      %vm427 = vmand %vm425, %vm426
      %428 = vst.msk [vmem:[%s257] sm:$0x3] %vm427, %v423
      %s429 = smul.u32 2, %s21
      %p430 = scmp.lt.s32.totalorder %s20, 1
      %s431 = scalar_select %p430, %s20, 1
      %p432 = scmp.lt.s32.totalorder %s429, 1
      %s433 = scalar_select %p432, %s429, 1
      %s434 = smul.addr %s431, 2
      %s435 = sadd.s32 %s433, %s434
      %s436 = smul.addr %s435, 8
      %s437 = scalar_lea.vmem %s3, %s436
      %s438 = smul.u32 2, %s21
      %p439 = scmp.lt.s32.totalorder %s20, 1
      %s440 = scalar_select %p439, %s20, 1
      %p441 = scmp.lt.s32.totalorder %s438, 1
      %s442 = scalar_select %p441, %s438, 1
      %s443 = smul.addr %s440, 2
      %s444 = sadd.s32 %s442, %s443
      %s445 = scalar_lea.vmem %s4, %s444
      // Predicated region
      $region33: #{encoder_decoder_wrapper_forward.1} parent=31 // pred_check
        %p446 = pneg %p118
      $region34: #{encoder_decoder_wrapper_forward.1} parent=31 // pred_check_branch
        %448 = sbr.rel (%p446) target = $region36
      $region35: #{encoder_decoder_wrapper_forward.1} parent=31 // pred_region
        %s449 = smul.u32 2, %s21
      $region36: #{encoder_decoder_wrapper_forward.1} parent=31 // pred_fallthru
        _
      // Predicated region
      $region37: #{encoder_decoder_wrapper_forward.1} parent=31 // pred_check
        %p450 = pneg %p146
      $region38: #{encoder_decoder_wrapper_forward.1} parent=31 // pred_check_branch
        %452 = sbr.rel (%p450) target = $region40
      $region39: #{encoder_decoder_wrapper_forward.1} parent=31 // pred_region
        %s453 = smul.u32 2, %s21
      $region40: #{encoder_decoder_wrapper_forward.1} parent=31 // pred_fallthru
        _
    $region32: #{encoder_decoder_wrapper_forward.1} parent=5 // pred_fallthru
      _
    %p454 = scmp.le.s32.totalorder 2, %s11
    // Predicated region
    $region41: #{encoder_decoder_wrapper_forward.1} parent=5 // pred_check
      %p455 = pneg %p454
    $region42: #{encoder_decoder_wrapper_forward.1} parent=5 // pred_check_branch
      %457 = sbr.rel (%p455) target = $region44
    $region43: #{encoder_decoder_wrapper_forward.1} parent=5 // pred_region
      %s458 = ssub.s32 %s11, 2
      // Predicated region
      $region45: #{encoder_decoder_wrapper_forward.1} parent=43 // pred_check
        %p459 = pneg %p124
      $region46: #{encoder_decoder_wrapper_forward.1} parent=43 // pred_check_branch
        %461 = sbr.rel (%p459) target = $region48
      $region47: #{encoder_decoder_wrapper_forward.1} parent=43 // pred_region
        %s462 = smul.u32 2, %s23
        %p463 = scmp.lt.s32.totalorder %s22, 1
        %s464 = scalar_select %p463, %s22, 1
        %p465 = scmp.lt.s32.totalorder %s462, 1
        %s466 = scalar_select %p465, %s462, 1
        %s467 = smul.addr %s464, 2
        %s468 = sadd.s32 %s466, %s467
        %s469 = smul.addr %s468, 8
        %s470 = scalar_lea.vmem %s3, %s469
      $region48: #{encoder_decoder_wrapper_forward.1} parent=43 // pred_fallthru
        _
      // Predicated region
      $region49: #{encoder_decoder_wrapper_forward.1} parent=43 // pred_check
        %p471 = pneg %p152
      $region50: #{encoder_decoder_wrapper_forward.1} parent=43 // pred_check_branch
        %473 = sbr.rel (%p471) target = $region52
      $region51: #{encoder_decoder_wrapper_forward.1} parent=43 // pred_region
        %s474 = smul.u32 2, %s23
        %p475 = scmp.lt.s32.totalorder %s22, 1
        %s476 = scalar_select %p475, %s22, 1
        %p477 = scmp.lt.s32.totalorder %s474, 1
        %s478 = scalar_select %p477, %s474, 1
        %s479 = smul.addr %s476, 2
        %s480 = sadd.s32 %s478, %s479
        %s481 = scalar_lea.vmem %s4, %s480
      $region52: #{encoder_decoder_wrapper_forward.1} parent=43 // pred_fallthru
        _
    $region44: #{encoder_decoder_wrapper_forward.1} parent=5 // pred_fallthru
      _
  $region6: #{encoder_decoder_wrapper_forward.1} parent=0 // loop_footer
    %s15 = sadd.s32 1, %s11
  $region7: #{encoder_decoder_wrapper_forward.1} parent=0 // loop_footer_branch
    %10 = sbr.rel target = $region3
  $region8: #{encoder_decoder_wrapper_forward.1} parent=0 // loop_exit
    _

</llo_original>
